<compile_context>
chip_gen: v7x
topology: tpu7x:2x2x1
jax: 0.10.0
libtpu: 0.0.40
codegen_flags: <defaults>
</compile_context>

<pallas_src>
import functools

import jax
import jax.numpy as jnp
from jax import lax
from jax.experimental import pallas as pl
from jax.experimental.pallas import tpu as pltpu


def _focal_partial_ce_kernel(logits_ref, target_ref, out_ref, *, n, tile_n, needs_mask):
    i = pl.program_id(0)

    x = logits_ref[...].astype(jnp.float32)              # (tile_n, C)
    tn, c = x.shape
    tgt = target_ref[...]                                 # (tile_n, 1) int32

    # Numerically stable per-row CE; the row-max cancels between the lse and
    # the gathered target logit, so only z = x - m is needed.
    m = jnp.max(x, axis=-1, keepdims=True)                # (tile_n, 1)
    z = x - m                                             # (tile_n, C)
    sumexp = jnp.sum(jnp.exp(z), axis=-1, keepdims=True)  # (tile_n, 1)

    # Target-class z via a broadcast (1, C) lane iota -- no full-block int32
    # iota and no explicit f32 one-hot / extra multiply.
    col = lax.broadcasted_iota(jnp.int32, (1, c), 1)      # (1, C)
    tgt_z = jnp.sum(jnp.where(col == tgt, z, 0.0), axis=-1, keepdims=True)  # (tile_n, 1)

    ce = jnp.log(sumexp) - tgt_z                          # per-sample CE (tile_n, 1)

    if needs_mask:
        # Mask rows past the true batch size (ragged last tile / padded rows).
        row = i * tile_n + lax.broadcasted_iota(jnp.int32, (tn, 1), 0)
        ce = jnp.where(row < n, ce, 0.0)

    partial = jnp.sum(ce)                                 # scalar partial CE sum
    out_ref[...] = jnp.full(out_ref.shape, partial, dtype=out_ref.dtype)


def _vmem_capacity_bytes():
    try:
        return int(pltpu.get_tpu_info().vmem_capacity_bytes)
    except Exception:
        return 64 * 1024 * 1024       # conservative (v7x-sized) fallback


def _pick_tile_n(n, c, itemsize, vmem_cap):
    padded_c = ((c + 127) // 128) * 128
    row_in = padded_c * itemsize       # streamed native-dtype row
    row_f32 = padded_c * 4             # in-kernel f32 row
    # Honest per-row VMEM footprint: 2x double-buffered input block plus ~5
    # full-block f32 temporaries materialized by the kernel body.
    row_cost = 2 * row_in + 5 * row_f32
    # ~32 MiB tile budget on v7x (64 MiB physical VMEM), ~48 MiB on v5e/v6e.
    budget = min(vmem_cap // 2, 48 * 1024 * 1024)
    tile_n = max(8, (budget // row_cost) // 8 * 8)        # rows: multiple of 8, no artificial cap
    n_pad8 = ((n + 7) // 8) * 8
    return int(min(tile_n, n_pad8)), int(budget)


def focal_loss(logits, target, gamma=2, alpha=1, *, tile_n=None):
    """logits: (N, C) float (any float dtype); target: (N,) integer class ids.

    Returns the scalar focal loss (f32), matching the PyTorch FocalLoss module.
    """
    n, c = logits.shape
    # NOTE: no upcast here -- stream the native dtype (halves DMA bytes for
    # bf16); the kernel casts to f32 for the softmax math.
    target2d = target.astype(jnp.int32).reshape(n, 1)

    vmem_cap = _vmem_capacity_bytes()
    auto_tile, budget = _pick_tile_n(n, c, jnp.dtype(logits.dtype).itemsize, vmem_cap)
    if tile_n is None:
        tile_n = auto_tile
    else:
        tile_n = int(min(((int(tile_n) + 7) // 8) * 8, ((n + 7) // 8) * 8))
    num_tiles = pl.cdiv(n, tile_n)

    # Scoped-VMEM limit with headroom above the tile budget (v5e default is
    # only 16 MiB), kept safely below physical capacity on every generation.
    vmem_limit = int(min(vmem_cap - 4 * 1024 * 1024, budget + 16 * 1024 * 1024))

    kernel = functools.partial(
        _focal_partial_ce_kernel,
        n=n, tile_n=tile_n, needs_mask=(n % tile_n != 0),
    )

    partials = pl.pallas_call(
        kernel,
        out_shape=jax.ShapeDtypeStruct((num_tiles, 1, 128), jnp.float32),
        grid=(num_tiles,),
        in_specs=[
            pl.BlockSpec((tile_n, c), lambda i: (i, 0)),   # logits tile (native dtype)
            pl.BlockSpec((tile_n, 1), lambda i: (i, 0)),   # target tile
        ],
        # Per-tile output block: independent writes, so the axis is parallel.
        out_specs=pl.BlockSpec((1, 1, 128), lambda i: (i, 0, 0)),
        compiler_params=pltpu.CompilerParams(
            dimension_semantics=("parallel",),             # megacore sharding on v7x
            vmem_limit_bytes=vmem_limit,
        ),
    )(logits, target2d)

    # Finalize in the wrapper: mean CE over the true N, then focal scaling.
    logp = jnp.sum(partials[:, 0, 0]) * jnp.float32(1.0 / n)
    p = jnp.exp(-logp)
    w = jnp.maximum(jnp.float32(1.0) - p, 0.0)             # clamp fp-rounding negatives
    if float(gamma) == int(gamma):
        focal = w ** int(gamma)                            # integer_pow, no log/exp pow
    else:
        focal = w ** jnp.float32(gamma)
    return jnp.float32(alpha) * focal * logp


def focal_loss_ref(logits, target, gamma=2, alpha=1):
    # Pure-JAX reference for sanity checking.
    x = logits.astype(jnp.float32)
    lse = jax.nn.logsumexp(x, axis=-1)
    tgt_logit = jnp.take_along_axis(x, target[:, None].astype(jnp.int32), axis=-1)[:, 0]
    logp = jnp.mean(lse - tgt_logit)
    p = jnp.exp(-logp)
    return alpha * jnp.maximum(1.0 - p, 0.0) ** gamma * logp


if __name__ == "__main__":
    key = jax.random.PRNGKey(0)
    k1, k2, k3, k4 = jax.random.split(key, 4)

    # Small shapes consistent with the module: batch=8 logits over 32 classes.
    N, C = 8, 32
    logits = jax.random.normal(k1, (N, C), dtype=jnp.float32)
    target = jax.random.randint(k2, (N,), 0, C, dtype=jnp.int32)

    loss = focal_loss(logits, target, gamma=2, alpha=1)
    jax.block_until_ready(loss)
    ref = focal_loss_ref(logits, target, gamma=2, alpha=1)
    assert jnp.allclose(loss, ref, atol=1e-5, rtol=1e-5), (loss, ref)

    # Second case exercising the streaming path: multiple row tiles plus a
    # ragged last tile that must be masked (forced small tile_n so the test is
    # device-independent).
    N2, C2 = 600, 256
    logits2 = jax.random.normal(k3, (N2, C2), dtype=jnp.float32)
    target2 = jax.random.randint(k4, (N2,), 0, C2, dtype=jnp.int32)

    loss2 = focal_loss(logits2, target2, gamma=2, alpha=1, tile_n=128)
    jax.block_until_ready(loss2)
    ref2 = focal_loss_ref(logits2, target2, gamma=2, alpha=1)
    assert jnp.allclose(loss2, ref2, atol=1e-4, rtol=1e-4), (loss2, ref2)

    print("KERNEL_OK")
</pallas_src>

<mosaic_0001>
module attributes {stable_mosaic.version = 11 : i64} {
  func.func @_focal_partial_ce_kernel(%arg0: i32, %arg1: memref<8x32xf32, #tpu.memory_space<vmem>>, %arg2: memref<8x1xi32, #tpu.memory_space<vmem>>, %arg3: memref<1x1x128xf32, #tpu.memory_space<vmem>>) attributes {dimension_semantics = [#tpu.dimension_semantics<parallel>], iteration_bounds = array<i64: 1>, scalar_prefetch = 0 : i64, scratch_operands = 0 : i64, tpu.core_type = #tpu.core_type<tc>, window_params = [{transform_indices = @transform_0, window_bounds = array<i64: 8, 32>}, {transform_indices = @transform_1, window_bounds = array<i64: 8, 1>}, {transform_indices = @transform_2, window_bounds = array<i64: 1, 1, 128>}]} {
    %c0 = arith.constant 0 : index
    %c0_0 = arith.constant 0 : index
    %0 = vector.load %arg1[%c0, %c0_0] : memref<8x32xf32, #tpu.memory_space<vmem>>, vector<8x32xf32>
    %c0_1 = arith.constant 0 : index
    %c0_2 = arith.constant 0 : index
    %1 = vector.load %arg2[%c0_1, %c0_2] : memref<8x1xi32, #tpu.memory_space<vmem>>, vector<8x1xi32>
    %cst = arith.constant dense<0xFF800000> : vector<8xf32>
    %2 = vector.multi_reduction <maximumf>, %0, %cst [1] : vector<8x32xf32> to vector<8xf32>
    %3 = vector.shape_cast %2 : vector<8xf32> to vector<8x1xf32>
    %4 = vector.broadcast %3 : vector<8x1xf32> to vector<8x32xf32>
    %5 = arith.subf %0, %4 : vector<8x32xf32>
    %6 = math.exp %5 : vector<8x32xf32>
    %cst_3 = arith.constant dense<0.000000e+00> : vector<8xf32>
    %7 = vector.multi_reduction <add>, %6, %cst_3 [1] : vector<8x32xf32> to vector<8xf32>
    %8 = vector.shape_cast %7 : vector<8xf32> to vector<8x1xf32>
    %9 = tpu.iota {dimensions = array<i32: 1>} : vector<1x32xi32>
    %10 = vector.broadcast %9 : vector<1x32xi32> to vector<8x32xi32>
    %11 = vector.broadcast %1 : vector<8x1xi32> to vector<8x32xi32>
    %12 = arith.cmpi eq, %10, %11 : vector<8x32xi32>
    %cst_4 = arith.constant 0.000000e+00 : f32
    %13 = vector.broadcast %cst_4 : f32 to vector<8x32xf32>
    %14 = arith.select %12, %5, %13 : vector<8x32xi1>, vector<8x32xf32>
    %cst_5 = arith.constant dense<0.000000e+00> : vector<8xf32>
    %15 = vector.multi_reduction <add>, %14, %cst_5 [1] : vector<8x32xf32> to vector<8xf32>
    %16 = vector.shape_cast %15 : vector<8xf32> to vector<8x1xf32>
    %17 = math.log %8 : vector<8x1xf32>
    %18 = arith.subf %17, %16 : vector<8x1xf32>
    %19 = vector.shape_cast %18 : vector<8x1xf32> to vector<1x8x1xf32>
    %cst_6 = arith.constant dense<0.000000e+00> : vector<1xf32>
    %20 = vector.multi_reduction <add>, %19, %cst_6 [1, 2] : vector<1x8x1xf32> to vector<1xf32>
    %21 = vector.shape_cast %20 : vector<1xf32> to vector<1x1x1xf32>
    %22 = vector.extract %21[0, 0, 0] : f32 from vector<1x1x1xf32>
    %23 = vector.broadcast %22 : f32 to vector<1x1x128xf32>
    %c0_7 = arith.constant 0 : index
    %c0_8 = arith.constant 0 : index
    %c0_9 = arith.constant 0 : index
    %24 = vector.load %arg3[%c0_7, %c0_8, %c0_9] : memref<1x1x128xf32, #tpu.memory_space<vmem>>, vector<1x1x128xf32>
    tpu.vector_store %arg3[%c0_7, %c0_8, %c0_9], %23 {strides = array<i32>} : memref<1x1x128xf32, #tpu.memory_space<vmem>>, vector<1x1x128xf32>,
    return
  }
  func.func @transform_0(%arg0: i32) -> (i32, i32) {
    %c0_i32 = arith.constant 0 : i32
    %c0_i32_0 = arith.constant 0 : i32
    return %arg0, %c0_i32 : i32, i32
  }
  func.func @transform_1(%arg0: i32) -> (i32, i32) {
    %c0_i32 = arith.constant 0 : i32
    %c0_i32_0 = arith.constant 0 : i32
    return %arg0, %c0_i32 : i32, i32
  }
  func.func @transform_2(%arg0: i32) -> (i32, i32, i32) {
    %c0_i32 = arith.constant 0 : i32
    %c0_i32_0 = arith.constant 0 : i32
    %c0_i32_1 = arith.constant 0 : i32
    return %arg0, %c0_i32, %c0_i32_0 : i32, i32, i32
  }
}

</mosaic_0001>

<llo_original>
// kernel: tpu_custom_call.1
$region0: #{tpu_custom_call.1}
  #allocation0 [shape = 'u32[]', space=smem, size = 0x4, offset = 0x4, fixed_abs, tag = 'smem constant byte address 0x4 - core index']
  #allocation1 [shape = 'u32[144,128]{1,0:T(1,128)}', space=vmem, size = 0x12000, scoped, tag = 'internal scratch']
  %s0 = inlined_call_operand.vmem [shape: f32[8,32], index: 0, kind: input, shape index: {}]
  %s1 = inlined_call_operand.vmem [shape: s32[8,1], index: 1, kind: input, shape index: {}]
  %s2 = inlined_call_operand.hbm [shape: f32[1,1,128], index: 2, kind: output, shape index: {}]
  %s3 = sld [smem:[#allocation0]]
  $region18: #{tpu_custom_call.1} parent=0
    _
  %s5 = ssub.s32 1, %s3
  %s6 = scalar_select 0, %s5, %s3
  $region1: #{tpu_custom_call.1} parent=0
    #allocation2 [shape = 'u8[512]{0}', space=vmem, size = 0x400, scoped, tag = 'output window, operand 0, single buffered']
    #allocation3 [shape = 's32[1]{0}', space=sflag, size = 0x4, scoped, tag = 'scoped memory for tpu_custom_call.1']
    %7 = vsyncpa [#allocation3], 0
    // Predicated region
    $region2: #{tpu_custom_call.1} parent=1 // pred_check
      _
    $region3: #{tpu_custom_call.1} parent=1 // pred_check_branch
      %9 = sbr.rel (0) target = $region5
    $region4: #{tpu_custom_call.1} parent=1 // pred_region
      _
    $region5: #{tpu_custom_call.1} parent=1 // pred_fallthru
      _
    // Predicated region
    $region6: #{tpu_custom_call.1} parent=1 // pred_check
      _
    $region7: #{tpu_custom_call.1} parent=1 // pred_check_branch
      %11 = sbr.rel (0) target = $region9
    $region8: #{tpu_custom_call.1} parent=1 // pred_region
      _
    $region9: #{tpu_custom_call.1} parent=1 // pred_fallthru
      _
    %v12 = vld [vmem:[%s0] sm:$0xff]
    %v13 = vld [vmem:[%s1] sm:$0xff]
    %vm14 = vcmask 261120
    %v15 = vsel %vm14, %v12, -inf
    %16 = vmax.xlane.f32.xlu0 %v15
    %v17 = vpop.xlane.xlu0 %16
    %v18 = vsub.f32 %v12, %v17
    %v19 = vmul.f32 %v18, 1.442695
    %v20 = vpow.pop %v19
    %v21 = vsel %vm14, %v20, 0.0
    %22 = vadd.xlane.f32.xlu0 %v21
    %v23 = vpop.xlane.xlu0 %22
    %v24 = vlaneseq
    %v25 = vand.u32 %v24, 127
    %26 = vset.pattern.permute.xlu0 0
    %27 = vperm.xlu0 %26, %v13
    %v28 = vpop.permute.xlu0 %27
    %vm29 = vcmp.eq.s32.totalorder %v25, %v28
    %v30 = vsel %vm29, %v18, 0.0
    %v31 = vsel %vm14, %v30, 0.0
    %32 = vadd.xlane.f32.xlu0 %v31
    %v33 = vpop.xlane.xlu0 %32
    %v34 = vlog2.pop %v23
    %v35 = vmul.f32 %v34, 0.6931472
    %v36 = vsub.f32 %v35, %v33
    %vm37 = vcmask 7168
    %v38 = vsel %vm37, %v36, 0.0
    %39 = vadd.xlane.f32.xlu0 %v38
    %v40 = vpop.xlane.xlu0 %39
    %v41 = vrot.slane %v40, 4
    %v42 = vadd.f32 %v40, %v41
    %v43 = vrot.slane %v42, 2
    %v44 = vadd.f32 %v42, %v43
    %v45 = vrot.slane %v44, 1
    %v46 = vadd.f32 %v44, %v45
    %s47 = vtos %v46
    %v48 = vstv %s47
    %49 = vst [vmem:[#allocation2] sm:$0x1] %v48
    // Predicated region
    $region10: #{tpu_custom_call.1} parent=1 // pred_check
      _
    $region11: #{tpu_custom_call.1} parent=1 // pred_check_branch
      %51 = sbr.rel (0) target = $region13
    $region12: #{tpu_custom_call.1} parent=1 // pred_region
      %s53 = ssub.s32 16, 16
      %54 = vsyncadd [#allocation3], %s53
      %s56 = sshll.u32 [#allocation2], 4
      %s57 = int_to_ptr.vmem [resolvable:$true] %s56
      %59 = dma.vmem_to_hbm [thread:$0]  %s57, 16, %s2, [#allocation3]
    $region13: #{tpu_custom_call.1} parent=1 // pred_fallthru
      _
    // Predicated region
    $region14: #{tpu_custom_call.1} parent=1 // pred_check
      _
    $region15: #{tpu_custom_call.1} parent=1 // pred_check_branch
      %61 = sbr.rel (0) target = $region17
    $region16: #{tpu_custom_call.1} parent=1 // pred_region
      %62 = dma.done [#allocation3], 16
    $region17: #{tpu_custom_call.1} parent=1 // pred_fallthru
      _
    %63 = vsyncpa [#allocation3], 1

</llo_original>
